<compile_context>
chip_gen: v7x
topology: tpu7x:2x2x1
jax: 0.10.0
libtpu: 0.0.40
codegen_flags: <defaults>
</compile_context>

<pallas_src>
import functools
import re

import jax
import jax.numpy as jnp
from jax.experimental import pallas as pl
from jax.experimental.pallas import tpu as pltpu


def _round_up(x, m):
    return (x + m - 1) // m * m


def _vmem_capacity_bytes():
    try:
        return int(pltpu.get_tpu_info().vmem_capacity_bytes)
    except Exception:
        return 64 * 1024 * 1024            # conservative default (v7x per-core VMEM)


def _tpu_generation():
    try:
        kind = jax.devices()[0].device_kind
    except Exception:
        kind = ""
    m = re.search(r"(\d+)", kind)
    return int(m.group(1)) if m else 6     # unknown -> assume modern (bf16 VPU)


# ----------------------------------------------------------------------------
# Kernel 1: adaLN branch (tiny, one-off):  shift, 1+scale = SiLU(c) @ W + b
# ----------------------------------------------------------------------------
def _adaln_kernel(c_ref, w_ref, b_ref, shift_ref, scale1_ref):
    cf = c_ref[...].astype(jnp.float32)                       # (B, Dc)
    silu = cf * jax.nn.sigmoid(cf)                            # VPU + EUP
    ada = jnp.dot(silu.astype(jnp.bfloat16), w_ref[...],      # bf16 MXU, f32 acc
                  preferred_element_type=jnp.float32)         # (B, 2H)
    ada = ada + b_ref[...].astype(jnp.float32)
    h = shift_ref.shape[-1]
    shift_ref[...] = ada[:, :h]
    scale1_ref[...] = 1.0 + ada[:, h:]


# ----------------------------------------------------------------------------
# Kernel 2: token-tiled LayerNorm -> modulate -> final linear (the hot path)
# ----------------------------------------------------------------------------
def _final_kernel(x_ref, shift_ref, scale1_ref, w_ref, b_ref, o_ref, *,
                  modulate_in_bf16):
    xf = x_ref[...].astype(jnp.float32)                       # (TN, H) f32
    inv_h = 1.0 / xf.shape[-1]

    # Two-pass LayerNorm statistics (no affine, eps = 1e-6).  xc is reused for
    # the normalize, so this is not more VPU work than the one-pass form and it
    # avoids the E[x^2] - E[x]^2 cancellation issue.
    mean = jnp.sum(xf, axis=-1, keepdims=True) * inv_h
    xc = xf - mean
    var = jnp.sum(xc * xc, axis=-1, keepdims=True) * inv_h
    xn = xc * jax.lax.rsqrt(var + 1e-6)                       # (TN, H) f32

    shift = shift_ref[...]                                    # (1, H) f32
    scale1 = scale1_ref[...]                                  # (1, H) f32  (= 1+scale)

    if modulate_in_bf16:
        # v6e/v7x: packed bf16 VALU halves the modulate bundles; the result
        # feeds the MXU as bf16 anyway, so accuracy is unchanged.
        xm = (xn.astype(jnp.bfloat16) * scale1.astype(jnp.bfloat16)
              + shift.astype(jnp.bfloat16))
    else:
        # v5e: no bf16 VPU path -> keep the modulate math in f32.
        xm = (xn * scale1 + shift).astype(jnp.bfloat16)

    y = jnp.dot(xm, w_ref[...], preferred_element_type=jnp.float32)  # (TN, P)
    o_ref[...] = (y + b_ref[...]).astype(o_ref.dtype)


# ----------------------------------------------------------------------------
# VMEM accounting / tile choice (generation-aware, one consistent estimate)
# ----------------------------------------------------------------------------
def _hot_vmem_bytes(tn, h, p, x_itemsize, out_itemsize):
    x_tiles = 2 * tn * h * x_itemsize               # double-buffered x tile
    out_tiles = 2 * tn * p * out_itemsize           # double-buffered out tile
    residents = 2 * (h * p * 2 + p * 4 + 2 * h * 4)  # W(bf16)/bias/shift/scale (<=2 bufs)
    temps = tn * h * (4 + 4 + 4 + 2) + tn * p * 4    # xf, xc, xn (f32), xm (bf16), y (f32)
    return x_tiles + out_tiles + residents + temps


def _choose_token_tile(n, h, p, x_itemsize, out_itemsize, budget_bytes):
    tn = min(2048, max(8, _round_up(n, 8)))
    tn = _round_up(tn, 8)
    while tn > 8 and _hot_vmem_bytes(tn, h, p, x_itemsize, out_itemsize) > budget_bytes:
        tn = max(8, _round_up(tn // 2, 8))
    return tn


# ----------------------------------------------------------------------------
# Wrapper
# ----------------------------------------------------------------------------
def prepare_final_layer_params(w_ada, b_ada, w_lin, b_lin):
    """One-time weight prep; hoist these casts out of the per-step wrapper."""
    return (w_ada.astype(jnp.bfloat16), b_ada.astype(jnp.float32),
            w_lin.astype(jnp.bfloat16), b_lin.astype(jnp.float32))


def parallel_final_layer(x, c, w_ada, b_ada, w_lin, b_lin, *, token_tile=None):
    """x: (B, N, H), c: (B, Dc); weights in (in, out) layout, biases as (1, out).

    Pass x (and the weights, e.g. via prepare_final_layer_params) as bf16 to
    halve the dominant HBM traffic; the output inherits x.dtype.
    """
    B, N, H = x.shape
    P = w_lin.shape[1]

    capacity = _vmem_capacity_bytes()
    modulate_in_bf16 = _tpu_generation() >= 6        # v5e and older: f32 VPU path

    # --- one-time dtype prep (no-ops when prepare_final_layer_params was used) ---
    w_ada_bf = w_ada if w_ada.dtype == jnp.bfloat16 else w_ada.astype(jnp.bfloat16)
    w_lin_bf = w_lin if w_lin.dtype == jnp.bfloat16 else w_lin.astype(jnp.bfloat16)
    b_lin_f32 = b_lin if b_lin.dtype == jnp.float32 else b_lin.astype(jnp.float32)

    # --- adaLN branch (tiny, one-off Pallas kernel) -> shift, 1+scale ---
    vmem = pl.BlockSpec(memory_space=pltpu.MemorySpace.VMEM)
    ada_bytes = (c.size * jnp.dtype(c.dtype).itemsize + w_ada_bf.size * 2
                 + b_ada.size * 4 + 6 * B * H * 4)
    ada_limit = int(min(capacity, max(32 << 20, 2 * ada_bytes + (8 << 20))))
    shift, scale1 = pl.pallas_call(
        _adaln_kernel,
        out_shape=(jax.ShapeDtypeStruct((B, H), jnp.float32),
                   jax.ShapeDtypeStruct((B, H), jnp.float32)),
        in_specs=[vmem, vmem, vmem],
        out_specs=(vmem, vmem),
        compiler_params=pltpu.CompilerParams(vmem_limit_bytes=ada_limit),
    )(c, w_ada_bf, b_ada)

    # (B, 1, H) so the hot kernel's per-batch row is selected purely by the
    # BlockSpec (last two block dims == full array dims, no dynamic slice).
    shift = shift.reshape(B, 1, H)
    scale1 = scale1.reshape(B, 1, H)

    # --- generation-aware token tiling ---
    x_itemsize = jnp.dtype(x.dtype).itemsize
    out_itemsize = x_itemsize
    budget = max(8 << 20, int(0.70 * capacity) - (4 << 20))
    if token_tile is None:
        tn = _choose_token_tile(N, H, P, x_itemsize, out_itemsize, budget)
    else:
        tn = max(8, min(_round_up(token_tile, 8), _round_up(N, 8)))
    need = _hot_vmem_bytes(tn, H, P, x_itemsize, out_itemsize)
    vmem_limit = int(min(capacity, max(32 << 20, need + (16 << 20))))

    grid = (pl.cdiv(N, tn), B)        # token axis leading: megacore balance at small B

    try:
        cost = pl.CostEstimate(
            flops=2 * B * N * H * P,
            transcendentals=B * N,
            bytes_accessed=(B * N * H * x_itemsize + B * N * P * out_itemsize
                            + H * P * 2 + 2 * B * H * 4 + P * 4))
    except Exception:
        cost = None

    kernel = functools.partial(_final_kernel, modulate_in_bf16=modulate_in_bf16)

    def run(resident_mode):
        def resident(shape):
            if resident_mode is None:
                return pl.BlockSpec(shape, lambda t, b: (0, 0))
            return pl.BlockSpec(shape, lambda t, b: (0, 0),
                                pipeline_mode=resident_mode)

        return pl.pallas_call(
            kernel,
            out_shape=jax.ShapeDtypeStruct((B, N, P), x.dtype),
            grid=grid,
            in_specs=[
                pl.BlockSpec((None, tn, H), lambda t, b: (b, t, 0)),   # pipelined x tiles
                pl.BlockSpec((None, 1, H), lambda t, b: (b, 0, 0)),    # shift (per-batch row)
                pl.BlockSpec((None, 1, H), lambda t, b: (b, 0, 0)),    # 1+scale (per-batch row)
                resident((H, P)),                                      # W (bf16), resident
                resident((1, P)),                                      # bias (f32), resident
            ],
            out_specs=pl.BlockSpec((None, tn, P), lambda t, b: (b, t, 0)),
            compiler_params=pltpu.CompilerParams(
                dimension_semantics=("parallel", "parallel"),
                vmem_limit_bytes=vmem_limit),
            cost_estimate=cost,
        )(x, shift, scale1, w_lin_bf, b_lin_f32)

    try:
        # Constant-index-map residents do not need the default double buffer.
        return run(pl.Buffered(1))
    except Exception:
        # Older jax without pipeline_mode / single-buffering support.
        return run(None)


# ----------------------------------------------------------------------------
# Plain-JAX reference (mirrors the PyTorch forward)
# ----------------------------------------------------------------------------
def _reference(x, c, w_ada, b_ada, w_lin, b_lin):
    x32 = x.astype(jnp.float32)
    c32 = c.astype(jnp.float32)
    ada = jax.nn.silu(c32) @ w_ada + b_ada[0]
    H = x.shape[-1]
    shift, scale = ada[:, :H], ada[:, H:]
    mean = jnp.mean(x32, axis=-1, keepdims=True)
    var = jnp.mean((x32 - mean) ** 2, axis=-1, keepdims=True)
    xn = (x32 - mean) / jnp.sqrt(var + 1e-6)
    xm = xn * (1.0 + scale[:, None, :]) + shift[:, None, :]
    y = xm @ w_lin + b_lin[0]
    return y


if __name__ == "__main__":
    # Small shapes consistent with the module.
    B, N, H = 2, 8, 32
    patch_size, out_channels = 2, 4
    out_dim = patch_size * patch_size * out_channels        # 16
    cond_dim = min(H, 1024)                                 # 32

    key = jax.random.PRNGKey(0)
    kx, kc, kwa, kba, kwl, kbl, kx2 = jax.random.split(key, 7)

    x = jax.random.normal(kx, (B, N, H), dtype=jnp.float32)
    c = jax.random.normal(kc, (B, cond_dim), dtype=jnp.float32)

    # NOTE: the module initializes these linears with zeros (trivial output);
    # small deterministic random weights are used so the kernels are exercised.
    w_ada = 0.02 * jax.random.normal(kwa, (cond_dim, 2 * H), dtype=jnp.float32)
    b_ada = 0.02 * jax.random.normal(kba, (1, 2 * H), dtype=jnp.float32)
    w_lin = 0.02 * jax.random.normal(kwl, (H, out_dim), dtype=jnp.float32)
    b_lin = 0.02 * jax.random.normal(kbl, (1, out_dim), dtype=jnp.float32)

    ref = _reference(x, c, w_ada, b_ada, w_lin, b_lin)

    # 1) f32 activations (bf16 MXU operands, f32 accumulation).
    out = jax.block_until_ready(
        parallel_final_layer(x, c, w_ada, b_ada, w_lin, b_lin))
    assert out.shape == (B, N, out_dim), out.shape
    assert jnp.allclose(out, ref, atol=1e-2, rtol=1e-2), \
        float(jnp.max(jnp.abs(out - ref)))

    # 2) bf16 activations (halves the dominant x HBM read; output is bf16).
    out_bf = jax.block_until_ready(
        parallel_final_layer(x.astype(jnp.bfloat16), c, w_ada, b_ada, w_lin, b_lin))
    assert out_bf.shape == (B, N, out_dim), out_bf.shape
    assert out_bf.dtype == jnp.bfloat16, out_bf.dtype
    assert jnp.allclose(out_bf.astype(jnp.float32), ref, atol=5e-2, rtol=5e-2), \
        float(jnp.max(jnp.abs(out_bf.astype(jnp.float32) - ref)))

    # 3) Ragged N (N % token_tile != 0): out-of-bounds tail rows must not leak.
    N2 = 12
    x2 = jax.random.normal(kx2, (B, N2, H), dtype=jnp.float32)
    out2 = jax.block_until_ready(
        parallel_final_layer(x2, c, w_ada, b_ada, w_lin, b_lin, token_tile=8))
    ref2 = _reference(x2, c, w_ada, b_ada, w_lin, b_lin)
    assert out2.shape == (B, N2, out_dim), out2.shape
    assert jnp.allclose(out2, ref2, atol=1e-2, rtol=1e-2), \
        float(jnp.max(jnp.abs(out2 - ref2)))

    print("KERNEL_OK")
</pallas_src>

<mosaic_0001>
module attributes {stable_mosaic.version = 11 : i64} {
  func.func @_adaln_kernel(%arg0: memref<2x32xf32, #tpu.memory_space<vmem>>, %arg1: memref<32x64xbf16, #tpu.memory_space<vmem>>, %arg2: memref<1x64xf32, #tpu.memory_space<vmem>>, %arg3: memref<2x32xf32, #tpu.memory_space<vmem>>, %arg4: memref<2x32xf32, #tpu.memory_space<vmem>>) attributes {dimension_semantics = [], scalar_prefetch = 0 : i64, scratch_operands = 0 : i64, tpu.core_type = #tpu.core_type<tc>} {
    %c0 = arith.constant 0 : index
    %c0_0 = arith.constant 0 : index
    %0 = vector.load %arg0[%c0, %c0_0] : memref<2x32xf32, #tpu.memory_space<vmem>>, vector<2x32xf32>
    %1 = arith.negf %0 : vector<2x32xf32>
    %2 = math.exp %1 : vector<2x32xf32>
    %cst = arith.constant 1.000000e+00 : f32
    %3 = vector.broadcast %cst : f32 to vector<2x32xf32>
    %4 = arith.addf %3, %2 : vector<2x32xf32>
    %5 = arith.divf %3, %4 : vector<2x32xf32>
    %6 = arith.mulf %0, %5 : vector<2x32xf32>
    %7 = arith.truncf %6 : vector<2x32xf32> to vector<2x32xbf16>
    %c0_1 = arith.constant 0 : index
    %c0_2 = arith.constant 0 : index
    %8 = vector.load %arg1[%c0_1, %c0_2] : memref<32x64xbf16, #tpu.memory_space<vmem>>, vector<32x64xbf16>
    %cst_3 = arith.constant dense<0.000000e+00> : vector<2x64xf32>
    %9 = tpu.matmul %7, %8, %cst_3 {dimension_numbers = #tpu.dot_dimension_numbers<[1], [0], [0], [1], [0, 0, 1, 1], [], []>} : vector<2x32xbf16>, vector<32x64xbf16>, vector<2x64xf32> -> vector<2x64xf32>
    %c0_4 = arith.constant 0 : index
    %c0_5 = arith.constant 0 : index
    %10 = vector.load %arg2[%c0_4, %c0_5] : memref<1x64xf32, #tpu.memory_space<vmem>>, vector<1x64xf32>
    %11 = vector.broadcast %10 : vector<1x64xf32> to vector<2x64xf32>
    %12 = arith.addf %9, %11 : vector<2x64xf32>
    %13 = vector.extract_strided_slice %12 {offsets = [0, 0], sizes = [2, 32], strides = [1, 1]} : vector<2x64xf32> to vector<2x32xf32>
    %c0_6 = arith.constant 0 : index
    %c0_7 = arith.constant 0 : index
    %14 = vector.load %arg3[%c0_6, %c0_7] : memref<2x32xf32, #tpu.memory_space<vmem>>, vector<2x32xf32>
    tpu.vector_store %arg3[%c0_6, %c0_7], %13 {strides = array<i32>} : memref<2x32xf32, #tpu.memory_space<vmem>>, vector<2x32xf32>,
    %15 = vector.extract_strided_slice %12 {offsets = [0, 32], sizes = [2, 32], strides = [1, 1]} : vector<2x64xf32> to vector<2x32xf32>
    %cst_8 = arith.constant 1.000000e+00 : f32
    %16 = vector.broadcast %cst_8 : f32 to vector<2x32xf32>
    %17 = arith.addf %16, %15 : vector<2x32xf32>
    %c0_9 = arith.constant 0 : index
    %c0_10 = arith.constant 0 : index
    %18 = vector.load %arg4[%c0_9, %c0_10] : memref<2x32xf32, #tpu.memory_space<vmem>>, vector<2x32xf32>
    tpu.vector_store %arg4[%c0_9, %c0_10], %17 {strides = array<i32>} : memref<2x32xf32, #tpu.memory_space<vmem>>, vector<2x32xf32>,
    return
  }
}

</mosaic_0001>

<llo_original>
// kernel: tpu_custom_call.1
$region0: #{tpu_custom_call.1}
  #allocation0 [shape = 'u32[]', space=smem, size = 0x4, offset = 0x4, fixed_abs, tag = 'smem constant byte address 0x4 - core index']
  #allocation1 [shape = 'u32[144,128]{1,0:T(1,128)}', space=vmem, size = 0x12000, scoped, tag = 'internal scratch']
  %s0 = inlined_call_operand.hbm [shape: f32[2,32], index: 0, kind: input, shape index: {}]
  %s1 = inlined_call_operand.hbm [shape: bf16[32,64], index: 1, kind: input, shape index: {}]
  %s2 = inlined_call_operand.vmem [shape: f32[1,64], index: 2, kind: input, shape index: {}]
  %s3 = inlined_call_operand.hbm [shape: f32[2,32], index: 3, kind: output, shape index: {0}]
  %s4 = inlined_call_operand.hbm [shape: f32[2,32], index: 4, kind: output, shape index: {1}]
  %5 = xla_tuple %s3, %s4
  %s6 = sld [smem:[#allocation0]]
  $region38: #{tpu_custom_call.1} parent=0
    _
  %s8 = ssub.s32 1, %s6
  %s9 = scalar_select 0, %s8, %s6
  $region1: #{tpu_custom_call.1} parent=0
    #allocation2 [shape = 'u8[1024]{0}', space=vmem, size = 0x400, scoped, tag = 'input window, operand 0, single buffered']
    #allocation3 [shape = 's32[1]{0}', space=sflag, size = 0x4, scoped, tag = 'scoped memory for tpu_custom_call.1']
    #allocation4 [shape = 's32[1]{0}', space=sflag, size = 0x4, scoped, tag = 'scoped memory for tpu_custom_call.1']
    #allocation5 [shape = 'u8[8192]{0}', space=vmem, size = 0x2000, scoped, tag = 'input window, operand 1, single buffered']
    #allocation6 [shape = 's32[1]{0}', space=sflag, size = 0x4, scoped, tag = 'scoped memory for tpu_custom_call.1']
    #allocation7 [shape = 'u8[1024]{0}', space=vmem, size = 0x400, scoped, tag = 'output window, operand 0, single buffered']
    #allocation8 [shape = 'u8[1024]{0}', space=vmem, size = 0x400, scoped, tag = 'output window, operand 1, single buffered']
    #allocation9 [shape = 's32[1]{0}', space=sflag, size = 0x4, scoped, tag = 'scoped memory for tpu_custom_call.1']
    %10 = vsyncpa [#allocation3], 0
    %11 = vsyncpa [#allocation6], 0
    %12 = vsyncpa [#allocation4], 0
    %13 = vsyncpa [#allocation9], 0
    // Predicated region
    $region2: #{tpu_custom_call.1} parent=1 // pred_check
      _
    $region3: #{tpu_custom_call.1} parent=1 // pred_check_branch
      %15 = sbr.rel (0) target = $region5
    $region4: #{tpu_custom_call.1} parent=1 // pred_region
      %s17 = ssub.s32 32, 32
      %18 = vsyncadd [#allocation3], %s17
      %s20 = sshll.u32 [#allocation2], 4
      %s21 = int_to_ptr.vmem [resolvable:$true] %s20
      %23 = dma.hbm_to_vmem [thread:$0]  %s0, 32, %s21, [#allocation3]
    $region5: #{tpu_custom_call.1} parent=1 // pred_fallthru
      _
    // Predicated region
    $region6: #{tpu_custom_call.1} parent=1 // pred_check
      _
    $region7: #{tpu_custom_call.1} parent=1 // pred_check_branch
      %25 = sbr.rel (0) target = $region9
    $region8: #{tpu_custom_call.1} parent=1 // pred_region
      %s27 = ssub.s32 256, 256
      %28 = vsyncadd [#allocation6], %s27
      %s29 = sshll.u32 [#allocation5], 4
      %s30 = int_to_ptr.vmem [resolvable:$true] %s29
      %35 = dma.hbm_to_vmem [thread:$0]  %s1, 256, %s30, [#allocation6], 64, 64, 4
    $region9: #{tpu_custom_call.1} parent=1 // pred_fallthru
      _
    // Predicated region
    $region10: #{tpu_custom_call.1} parent=1 // pred_check
      _
    $region11: #{tpu_custom_call.1} parent=1 // pred_check_branch
      %37 = sbr.rel (0) target = $region13
    $region12: #{tpu_custom_call.1} parent=1 // pred_region
      _
    $region13: #{tpu_custom_call.1} parent=1 // pred_fallthru
      _
    // Predicated region
    $region14: #{tpu_custom_call.1} parent=1 // pred_check
      _
    $region15: #{tpu_custom_call.1} parent=1 // pred_check_branch
      %39 = sbr.rel (0) target = $region17
    $region16: #{tpu_custom_call.1} parent=1 // pred_region
      %40 = dma.done [#allocation3], 32
    $region17: #{tpu_custom_call.1} parent=1 // pred_fallthru
      _
    // Predicated region
    $region18: #{tpu_custom_call.1} parent=1 // pred_check
      _
    $region19: #{tpu_custom_call.1} parent=1 // pred_check_branch
      %42 = sbr.rel (0) target = $region21
    $region20: #{tpu_custom_call.1} parent=1 // pred_region
      %43 = dma.done [#allocation6], 256
    $region21: #{tpu_custom_call.1} parent=1 // pred_fallthru
      _
    %v45 = vld [vmem:[#allocation2] sm:$0x3]
    %v46 = vxor.u32 %v45, 2147483648
    %v47 = vmul.f32 %v46, 1.442695
    %v48 = vpow.pop %v47
    %v49 = vadd.f32 %v48, 1.0
    %v50 = vrcp.pop %v49
    %v51 = vmul.f32 1.0, %v50
    %v52 = vmul.f32 %v45, %v51
    %v53 = vpack.c.bf16 %v52, %v52
    %v54 = vld [vmem:[#allocation5] sm:$0xf]
    %v55 = vld [vmem:[#allocation5 + $0x4] sm:$0xf]
    %v56 = vld [vmem:[#allocation5 + $0x8] sm:$0xf]
    %v57 = vld [vmem:[#allocation5 + $0xc] sm:$0xf]
    %v58 = vld [vmem:[%s2] sm:$0x1]
    %v60 = vlaneseq
    %v61 = vshrl.u32 %v60, 7
    %v62 = vsub.s32 0, %v61
    %v63 = vrot.slane %v58, %v62
    %v69 = vunpack.c.l.b16 %v54
    %v70 = vunpack.c.l.b16 %v55
    %v71 = vunpack.c.l.b16 %v56
    %v72 = vunpack.c.l.b16 %v57
    %v73 = vpack.c.b16 %v70, %v69
    %v74 = vpack.c.b16 %v72, %v71
    %vm77 = vcmask 261120
    %v79 = vsel %vm77, %v53, 0
    %81 = vmatprep.subr.bf16.mxu0 0
    %82 = vmatpush1.bf16.msra.mxu0 %v73
    %83 = vmatprep.subr.bf16.mxu0 0
    %84 = vmatpush1.bf16.msra.mxu0 %v74
    %85 = vmatprep.subr.bf16.mxu0 0
    %86 = vmatpush1.bf16.msra.mxu0 0
    %87 = vmatprep.subr.bf16.mxu0 0
    %88 = vmatpush1.bf16.msra.mxu0 0
    %89 = vmatprep.subr.bf16.mxu0 0
    %90 = vmatpush1.bf16.msra.mxu0 0
    %91 = vmatprep.subr.bf16.mxu0 0
    %92 = vmatpush1.bf16.msra.mxu0 0
    %93 = vmatprep.subr.bf16.mxu0 0
    %94 = vmatpush1.bf16.msra.mxu0 0
    %95 = vmatprep.subr.bf16.mxu0 0
    %96 = vmatpush1.bf16.msra.mxu0 0
    %97 = vmatprep.subr.bf16.mxu0 0
    %98 = vmatpush1.bf16.msra.mxu0 0
    %99 = vmatprep.subr.bf16.mxu0 0
    %100 = vmatpush1.bf16.msra.mxu0 0
    %101 = vmatprep.subr.bf16.mxu0 0
    %102 = vmatpush1.bf16.msra.mxu0 0
    %103 = vmatprep.subr.bf16.mxu0 0
    %104 = vmatpush1.bf16.msra.mxu0 0
    %105 = vmatprep.subr.bf16.mxu0 0
    %106 = vmatpush1.bf16.msra.mxu0 0
    %107 = vmatprep.subr.bf16.mxu0 0
    %108 = vmatpush1.bf16.msra.mxu0 0
    %109 = vmatprep.subr.bf16.mxu0 0
    %110 = vmatpush1.bf16.msra.mxu0 0
    %111 = vmatprep.subr.bf16.mxu0 0
    %112 = vmatpush1.bf16.msra.mxu0 0
    %113 = vmatprep.mubr.bf16.mxu0 0
    %114 = vmatmul.mubr.bf16.gmra.mrb[0].mxu0 %v79
    %v115 = vpop.f32.mrb[0].mxu0
    %v116 = vadd.f32 %v63, %v115
    %v117 = vpop.f32.mrb[0].mxu0
    %v118 = vpop.f32.mrb[0].mxu0
    %v119 = vpop.f32.mrb[0].mxu0
    %120 = vdwg.mxu0
    %vm121 = vcmask 254976
    %122 = vst.msk [vmem:[#allocation7] sm:$0x3] %vm121, %v116
    %v123 = vadd.f32 %v116, 1.0
    %125 = vrot.lane.b32.xlu0 %v123, 96
    %v126 = vpop.permute.xlu0 %125
    %128 = vst.msk [vmem:[#allocation8] sm:$0x3] %vm121, %v126
    // Predicated region
    $region22: #{tpu_custom_call.1} parent=1 // pred_check
      _
    $region23: #{tpu_custom_call.1} parent=1 // pred_check_branch
      %130 = sbr.rel (0) target = $region25
    $region24: #{tpu_custom_call.1} parent=1 // pred_region
      %s132 = ssub.s32 32, 32
      %133 = vsyncadd [#allocation4], %s132
      %s135 = sshll.u32 [#allocation7], 4
      %s136 = int_to_ptr.vmem [resolvable:$true] %s135
      %138 = dma.vmem_to_hbm [thread:$0]  %s136, 32, %s3, [#allocation4]
    $region25: #{tpu_custom_call.1} parent=1 // pred_fallthru
      _
    // Predicated region
    $region26: #{tpu_custom_call.1} parent=1 // pred_check
      _
    $region27: #{tpu_custom_call.1} parent=1 // pred_check_branch
      %140 = sbr.rel (0) target = $region29
    $region28: #{tpu_custom_call.1} parent=1 // pred_region
      %s142 = ssub.s32 32, 32
      %143 = vsyncadd [#allocation9], %s142
      %s145 = sshll.u32 [#allocation8], 4
      %s146 = int_to_ptr.vmem [resolvable:$true] %s145
      %148 = dma.vmem_to_hbm [thread:$0]  %s146, 32, %s4, [#allocation9]
    $region29: #{tpu_custom_call.1} parent=1 // pred_fallthru
      _
    // Predicated region
    $region30: #{tpu_custom_call.1} parent=1 // pred_check
      _
    $region31: #{tpu_custom_call.1} parent=1 // pred_check_branch
      %150 = sbr.rel (0) target = $region33
    $region32: #{tpu_custom_call.1} parent=1 // pred_region
      %151 = dma.done [#allocation4], 32
    $region33: #{tpu_custom_call.1} parent=1 // pred_fallthru
      _
    // Predicated region
    $region34: #{tpu_custom_call.1} parent=1 // pred_check
      _
    $region35: #{tpu_custom_call.1} parent=1 // pred_check_branch
      %153 = sbr.rel (0) target = $region37
    $region36: #{tpu_custom_call.1} parent=1 // pred_region
      %154 = dma.done [#allocation9], 32
    $region37: #{tpu_custom_call.1} parent=1 // pred_fallthru
      _
    %155 = vsyncpa [#allocation3], 1
    %156 = vsyncpa [#allocation6], 1
    %157 = vsyncpa [#allocation4], 1
    %158 = vsyncpa [#allocation9], 1

</llo_original>
